<compile_context>
chip_gen: v7x
topology: tpu7x:2x2x1
jax: 0.10.0
libtpu: 0.0.40
codegen_flags: <defaults>
</compile_context>

<pallas_src>
import functools
import math

import numpy as np
import jax
import jax.numpy as jnp
from jax.experimental import pallas as pl
from jax.experimental.pallas import tpu as pltpu


def _time_encode_kernel(ts_ref, freq_ref, *rest, add_phase):
    # ts_ref:    (T, P)    f32  — P consecutive tokens per packed output row
    # freq_ref:  (1, P*D)  f32  — basis_freq tiled P times along lanes (resident)
    # phase_ref: (1, P*D)  f32  — only present when add_phase
    # out_ref:   (T, P*D)       — lane-dense output rows
    if add_phase:
        phase_ref, out_ref = rest
    else:
        (out_ref,) = rest
        phase_ref = None

    ts = ts_ref[...]                               # (T, P)
    T, P = ts_ref.shape
    lane = out_ref.shape[-1]
    D = lane // P

    # Broadcast each ts value across its D-lane span: (T, P) -> (T, P*D).
    # Size-1 lane broadcasts + one lane concat; exact f32, no relayout to 3-D.
    cols = [jnp.broadcast_to(ts[:, p:p + 1], (T, D)) for p in range(P)]
    ts_b = jnp.concatenate(cols, axis=-1)          # (T, P*D)

    map_ts = ts_b * freq_ref[...]                  # 1 VALU op/elem, exact f32
    if add_phase:
        map_ts = map_ts + phase_ref[...]
    out_ref[...] = jnp.cos(map_ts).astype(out_ref.dtype)   # lane-dense store


def _pack_width(D: int) -> int:
    """Tokens packed per output row: lane width P*D is a multiple of 128, ~512."""
    g = 128 // math.gcd(D, 128)          # minimal P with P*D % 128 == 0
    reps = max(1, 512 // (g * D))        # widen toward ~512-lane rows
    return g * reps


def _pick_tile(rows: int, lane: int, tile_rows: int) -> int:
    """Packed rows per grid step (multiple of 8, or the full extent)."""
    # VMEM cap: keep the f32 output block at <= ~8 MiB so double-buffered
    # in/out + elementwise temporaries fit v7x's 64 MiB with margin.
    vmem_cap = max(8, (8 * 1024 * 1024 // (lane * 4)) // 8 * 8)
    cap = max(8, (min(tile_rows, vmem_cap) // 8) * 8)
    # v7x: guarantee >= 2 grid steps so ("parallel",) uses both TensorCores.
    half = -(-rows // 2)
    half = -(-half // 8) * 8
    tile = min(cap, half)
    return rows if tile >= rows else tile


def time_encode(ts, basis_freq, phase, *, tile_rows=2048, out_dtype=jnp.float32):
    """ts: (B, S) f32; basis_freq, phase: (D,) f32 -> (B, S, D) out_dtype.

    out_dtype=jnp.bfloat16 halves HBM write traffic (the dominant stream) if
    the consumer tolerates ~1e-2 abs error; default f32 matches PyTorch.
    On v5e/v6e (128 MiB VMEM) tile_rows up to 4096 further amortizes per-step
    overhead; the default is sized for v7x's 64 MiB VMEM as well.
    """
    assert ts.ndim == 2, "ts must be (batch, seq_len)"
    B, S = ts.shape
    D = int(basis_freq.shape[0])
    P = _pack_width(D)
    lane = P * D

    n_tok = B * S
    rows = -(-n_tok // P)                 # ceil(n_tok / P)
    pad = rows * P - n_tok                # nonzero only if n_tok % P != 0

    ts_flat = ts.reshape(-1).astype(jnp.float32)
    if pad:
        ts_flat = jnp.pad(ts_flat, (0, pad))
    ts_rows = ts_flat.reshape(rows, P)

    freq_row = jnp.tile(basis_freq.astype(jnp.float32).reshape(1, D), (1, P))

    # Phase fast path: skip the per-element add when phase is concretely zero
    # (as at TimeEncode.__init__).  Under tracing we conservatively keep it.
    try:
        add_phase = bool(np.any(np.asarray(phase)))
    except Exception:
        add_phase = True

    tile = _pick_tile(rows, lane, tile_rows)
    grid = (-(-rows // tile),)            # partial last block is masked by Pallas

    in_specs = [
        pl.BlockSpec((tile, P), lambda i: (i, 0)),
        pl.BlockSpec((1, lane), lambda i: (0, 0)),   # resident across grid
    ]
    operands = [ts_rows, freq_row]
    if add_phase:
        phase_row = jnp.tile(phase.astype(jnp.float32).reshape(1, D), (1, P))
        in_specs.append(pl.BlockSpec((1, lane), lambda i: (0, 0)))  # resident
        operands.append(phase_row)

    out_rows = pl.pallas_call(
        functools.partial(_time_encode_kernel, add_phase=add_phase),
        out_shape=jax.ShapeDtypeStruct((rows, lane), out_dtype),
        grid_spec=pl.GridSpec(
            grid=grid,
            in_specs=in_specs,
            out_specs=pl.BlockSpec((tile, lane), lambda i: (i, 0)),
        ),
        compiler_params=pltpu.CompilerParams(
            dimension_semantics=("parallel",),     # v7x: rows split across 2 TCs
            vmem_limit_bytes=48 * 1024 * 1024,     # < 64 MiB physical on v7x
        ),
    )(*operands)

    if pad:
        # Only non-divisible token counts pay this clipping copy.
        return out_rows.reshape(-1)[: n_tok * D].reshape(B, S, D)
    # Packed rows are exactly the row-major layout of (B, S, D): free reshape.
    return out_rows.reshape(B, S, D)


def _reference(ts, basis_freq, phase):
    return jnp.cos(ts[:, :, None] * basis_freq[None, None, :]
                   + phase[None, None, :])


if __name__ == "__main__":
    # Module config (matches TimeEncode.__init__): expand_dim = 32
    expand_dim = 32
    basis_freq = jnp.asarray(
        1.0 / 10 ** np.linspace(0, 9, expand_dim), dtype=jnp.float32)
    phase_zero = jnp.zeros((expand_dim,), dtype=jnp.float32)

    key = jax.random.PRNGKey(0)
    k1, k2, k3, k4 = jax.random.split(key, 4)

    # --- Test 1: small (B=2, S=8) — single block, zero-phase fast path ---
    B, S = 2, 8
    ts_small = jax.random.uniform(k1, (B, S), dtype=jnp.float32) * 100.0
    out_small = jax.block_until_ready(time_encode(ts_small, basis_freq, phase_zero))
    assert out_small.shape == (B, S, expand_dim)
    np.testing.assert_allclose(np.asarray(out_small),
                               np.asarray(_reference(ts_small, basis_freq, phase_zero)),
                               rtol=1e-5, atol=1e-5)

    # --- Test 2: uneven B*S (pad + masked partial last grid block) ---
    B2, S2 = 3, 700
    ts_big = jax.random.uniform(k2, (B2, S2), dtype=jnp.float32) * 100.0
    out_big = jax.block_until_ready(
        time_encode(ts_big, basis_freq, phase_zero, tile_rows=128))
    assert out_big.shape == (B2, S2, expand_dim)
    np.testing.assert_allclose(np.asarray(out_big),
                               np.asarray(_reference(ts_big, basis_freq, phase_zero)),
                               rtol=1e-5, atol=1e-5)

    # --- Test 3: non-zero phase path (general kernel), multi-step grid ---
    B3, S3 = 2, 100
    ts_p = jax.random.uniform(k3, (B3, S3), dtype=jnp.float32) * 100.0
    phase_rand = jax.random.uniform(k4, (expand_dim,), dtype=jnp.float32) * 2.0 * np.pi
    out_p = jax.block_until_ready(time_encode(ts_p, basis_freq, phase_rand))
    assert out_p.shape == (B3, S3, expand_dim)
    np.testing.assert_allclose(np.asarray(out_p),
                               np.asarray(_reference(ts_p, basis_freq, phase_rand)),
                               rtol=1e-5, atol=1e-5)

    # --- Test 4: bf16 output path (compute f32, cast at final store) ---
    out_bf16 = jax.block_until_ready(
        time_encode(ts_small, basis_freq, phase_zero, out_dtype=jnp.bfloat16))
    np.testing.assert_allclose(np.asarray(out_bf16.astype(jnp.float32)),
                               np.asarray(_reference(ts_small, basis_freq, phase_zero)),
                               rtol=0.0, atol=1e-2)

    print("KERNEL_OK")
</pallas_src>

<mosaic_0001>
module attributes {stable_mosaic.version = 11 : i64} {
  func.func @_time_encode_kernel(%arg0: i32, %arg1: memref<1x16xf32, #tpu.memory_space<vmem>>, %arg2: memref<1x512xf32, #tpu.memory_space<vmem>>, %arg3: memref<1x512xf32, #tpu.memory_space<vmem>>) attributes {dimension_semantics = [#tpu.dimension_semantics<parallel>], iteration_bounds = array<i64: 1>, scalar_prefetch = 0 : i64, scratch_operands = 0 : i64, tpu.core_type = #tpu.core_type<tc>, window_params = [{transform_indices = @transform_0, window_bounds = array<i64: 1, 16>}, {pipeline_mode = #tpu.pipeline_mode<synchronous>, transform_indices = @transform_1, window_bounds = array<i64: 1, 512>}, {transform_indices = @transform_2, window_bounds = array<i64: 1, 512>}]} {
    %c0 = arith.constant 0 : index
    %c0_0 = arith.constant 0 : index
    %0 = vector.load %arg1[%c0, %c0_0] : memref<1x16xf32, #tpu.memory_space<vmem>>, vector<1x16xf32>
    %1 = vector.extract_strided_slice %0 {offsets = [0, 0], sizes = [1, 1], strides = [1, 1]} : vector<1x16xf32> to vector<1x1xf32>
    %2 = vector.shape_cast %1 : vector<1x1xf32> to vector<1x1xf32>
    %3 = vector.broadcast %2 : vector<1x1xf32> to vector<1x32xf32>
    %4 = vector.extract_strided_slice %0 {offsets = [0, 1], sizes = [1, 1], strides = [1, 1]} : vector<1x16xf32> to vector<1x1xf32>
    %5 = vector.shape_cast %4 : vector<1x1xf32> to vector<1x1xf32>
    %6 = vector.broadcast %5 : vector<1x1xf32> to vector<1x32xf32>
    %7 = vector.extract_strided_slice %0 {offsets = [0, 2], sizes = [1, 1], strides = [1, 1]} : vector<1x16xf32> to vector<1x1xf32>
    %8 = vector.shape_cast %7 : vector<1x1xf32> to vector<1x1xf32>
    %9 = vector.broadcast %8 : vector<1x1xf32> to vector<1x32xf32>
    %10 = vector.extract_strided_slice %0 {offsets = [0, 3], sizes = [1, 1], strides = [1, 1]} : vector<1x16xf32> to vector<1x1xf32>
    %11 = vector.shape_cast %10 : vector<1x1xf32> to vector<1x1xf32>
    %12 = vector.broadcast %11 : vector<1x1xf32> to vector<1x32xf32>
    %13 = vector.extract_strided_slice %0 {offsets = [0, 4], sizes = [1, 1], strides = [1, 1]} : vector<1x16xf32> to vector<1x1xf32>
    %14 = vector.shape_cast %13 : vector<1x1xf32> to vector<1x1xf32>
    %15 = vector.broadcast %14 : vector<1x1xf32> to vector<1x32xf32>
    %16 = vector.extract_strided_slice %0 {offsets = [0, 5], sizes = [1, 1], strides = [1, 1]} : vector<1x16xf32> to vector<1x1xf32>
    %17 = vector.shape_cast %16 : vector<1x1xf32> to vector<1x1xf32>
    %18 = vector.broadcast %17 : vector<1x1xf32> to vector<1x32xf32>
    %19 = vector.extract_strided_slice %0 {offsets = [0, 6], sizes = [1, 1], strides = [1, 1]} : vector<1x16xf32> to vector<1x1xf32>
    %20 = vector.shape_cast %19 : vector<1x1xf32> to vector<1x1xf32>
    %21 = vector.broadcast %20 : vector<1x1xf32> to vector<1x32xf32>
    %22 = vector.extract_strided_slice %0 {offsets = [0, 7], sizes = [1, 1], strides = [1, 1]} : vector<1x16xf32> to vector<1x1xf32>
    %23 = vector.shape_cast %22 : vector<1x1xf32> to vector<1x1xf32>
    %24 = vector.broadcast %23 : vector<1x1xf32> to vector<1x32xf32>
    %25 = vector.extract_strided_slice %0 {offsets = [0, 8], sizes = [1, 1], strides = [1, 1]} : vector<1x16xf32> to vector<1x1xf32>
    %26 = vector.shape_cast %25 : vector<1x1xf32> to vector<1x1xf32>
    %27 = vector.broadcast %26 : vector<1x1xf32> to vector<1x32xf32>
    %28 = vector.extract_strided_slice %0 {offsets = [0, 9], sizes = [1, 1], strides = [1, 1]} : vector<1x16xf32> to vector<1x1xf32>
    %29 = vector.shape_cast %28 : vector<1x1xf32> to vector<1x1xf32>
    %30 = vector.broadcast %29 : vector<1x1xf32> to vector<1x32xf32>
    %31 = vector.extract_strided_slice %0 {offsets = [0, 10], sizes = [1, 1], strides = [1, 1]} : vector<1x16xf32> to vector<1x1xf32>
    %32 = vector.shape_cast %31 : vector<1x1xf32> to vector<1x1xf32>
    %33 = vector.broadcast %32 : vector<1x1xf32> to vector<1x32xf32>
    %34 = vector.extract_strided_slice %0 {offsets = [0, 11], sizes = [1, 1], strides = [1, 1]} : vector<1x16xf32> to vector<1x1xf32>
    %35 = vector.shape_cast %34 : vector<1x1xf32> to vector<1x1xf32>
    %36 = vector.broadcast %35 : vector<1x1xf32> to vector<1x32xf32>
    %37 = vector.extract_strided_slice %0 {offsets = [0, 12], sizes = [1, 1], strides = [1, 1]} : vector<1x16xf32> to vector<1x1xf32>
    %38 = vector.shape_cast %37 : vector<1x1xf32> to vector<1x1xf32>
    %39 = vector.broadcast %38 : vector<1x1xf32> to vector<1x32xf32>
    %40 = vector.extract_strided_slice %0 {offsets = [0, 13], sizes = [1, 1], strides = [1, 1]} : vector<1x16xf32> to vector<1x1xf32>
    %41 = vector.shape_cast %40 : vector<1x1xf32> to vector<1x1xf32>
    %42 = vector.broadcast %41 : vector<1x1xf32> to vector<1x32xf32>
    %43 = vector.extract_strided_slice %0 {offsets = [0, 14], sizes = [1, 1], strides = [1, 1]} : vector<1x16xf32> to vector<1x1xf32>
    %44 = vector.shape_cast %43 : vector<1x1xf32> to vector<1x1xf32>
    %45 = vector.broadcast %44 : vector<1x1xf32> to vector<1x32xf32>
    %46 = vector.extract_strided_slice %0 {offsets = [0, 15], sizes = [1, 1], strides = [1, 1]} : vector<1x16xf32> to vector<1x1xf32>
    %47 = vector.shape_cast %46 : vector<1x1xf32> to vector<1x1xf32>
    %48 = vector.broadcast %47 : vector<1x1xf32> to vector<1x32xf32>
    %49 = tpu.concatenate %3, %6, %9, %12, %15, %18, %21, %24, %27, %30, %33, %36, %39, %42, %45, %48 in 1 : vector<1x32xf32>, vector<1x32xf32>, vector<1x32xf32>, vector<1x32xf32>, vector<1x32xf32>, vector<1x32xf32>, vector<1x32xf32>, vector<1x32xf32>, vector<1x32xf32>, vector<1x32xf32>, vector<1x32xf32>, vector<1x32xf32>, vector<1x32xf32>, vector<1x32xf32>, vector<1x32xf32>, vector<1x32xf32> -> vector<1x512xf32>
    %c0_1 = arith.constant 0 : index
    %c0_2 = arith.constant 0 : index
    %50 = vector.load %arg2[%c0_1, %c0_2] : memref<1x512xf32, #tpu.memory_space<vmem>>, vector<1x512xf32>
    %51 = arith.mulf %49, %50 : vector<1x512xf32>
    %52 = math.cos %51 : vector<1x512xf32>
    %c0_3 = arith.constant 0 : index
    %c0_4 = arith.constant 0 : index
    %53 = vector.load %arg3[%c0_3, %c0_4] : memref<1x512xf32, #tpu.memory_space<vmem>>, vector<1x512xf32>
    tpu.vector_store %arg3[%c0_3, %c0_4], %52 {strides = array<i32>} : memref<1x512xf32, #tpu.memory_space<vmem>>, vector<1x512xf32>,
    return
  }
  func.func @transform_0(%arg0: i32) -> (i32, i32) {
    %c0_i32 = arith.constant 0 : i32
    %c0_i32_0 = arith.constant 0 : i32
    return %arg0, %c0_i32 : i32, i32
  }
  func.func @transform_1(%arg0: i32) -> (i32, i32) {
    %c0_i32 = arith.constant 0 : i32
    %c0_i32_0 = arith.constant 0 : i32
    %c0_i32_1 = arith.constant 0 : i32
    return %c0_i32, %c0_i32_0 : i32, i32
  }
  func.func @transform_2(%arg0: i32) -> (i32, i32) {
    %c0_i32 = arith.constant 0 : i32
    %c0_i32_0 = arith.constant 0 : i32
    return %arg0, %c0_i32 : i32, i32
  }
}

</mosaic_0001>

<llo_original>
// kernel: tpu_custom_call.1
$region0: #{tpu_custom_call.1}
  #allocation0 [shape = 'u32[]', space=smem, size = 0x4, offset = 0x4, fixed_abs, tag = 'smem constant byte address 0x4 - core index']
  #allocation1 [shape = 'u32[144,128]{1,0:T(1,128)}', space=vmem, size = 0x12000, scoped, tag = 'internal scratch']
  %s0 = inlined_call_operand.hbm [shape: f32[1,16], index: 0, kind: input, shape index: {}]
  %s1 = inlined_call_operand.hbm [shape: f32[1,512], index: 1, kind: input, shape index: {}]
  %s2 = inlined_call_operand.hbm [shape: f32[1,512], index: 2, kind: output, shape index: {}]
  %s3 = sld [smem:[#allocation0]]
  $region26: #{tpu_custom_call.1} parent=0
    _
  %s5 = ssub.s32 1, %s3
  %s6 = scalar_select 0, %s5, %s3
  $region1: #{tpu_custom_call.1} parent=0
    #allocation2 [shape = 'u8[512]{0}', space=vmem, size = 0x400, scoped, tag = 'input window, operand 0, single buffered']
    #allocation3 [shape = 's32[1]{0}', space=sflag, size = 0x4, scoped, tag = 'scoped memory for tpu_custom_call.1']
    #allocation4 [shape = 's32[1]{0}', space=sflag, size = 0x4, scoped, tag = 'scoped memory for tpu_custom_call.1']
    #allocation5 [shape = 'u8[2048]{0}', space=vmem, size = 0x800, scoped, tag = 'input window, operand 1, single buffered']
    #allocation6 [shape = 's32[1]{0}', space=sflag, size = 0x4, scoped, tag = 'scoped memory for tpu_custom_call.1']
    #allocation7 [shape = 'u8[2048]{0}', space=vmem, size = 0x800, scoped, tag = 'output window, operand 0, single buffered']
    %7 = vsyncpa [#allocation3], 0
    %8 = vsyncpa [#allocation6], 0
    %9 = vsyncpa [#allocation4], 0
    // Predicated region
    $region2: #{tpu_custom_call.1} parent=1 // pred_check
      _
    $region3: #{tpu_custom_call.1} parent=1 // pred_check_branch
      %11 = sbr.rel (0) target = $region5
    $region4: #{tpu_custom_call.1} parent=1 // pred_region
      %s13 = ssub.s32 16, 16
      %14 = vsyncadd [#allocation3], %s13
      %s16 = sshll.u32 [#allocation2], 4
      %s17 = int_to_ptr.vmem [resolvable:$true] %s16
      %19 = dma.hbm_to_vmem [thread:$0]  %s0, 16, %s17, [#allocation3]
    $region5: #{tpu_custom_call.1} parent=1 // pred_fallthru
      _
    // Predicated region
    $region6: #{tpu_custom_call.1} parent=1 // pred_check
      _
    $region7: #{tpu_custom_call.1} parent=1 // pred_check_branch
      %21 = sbr.rel (0) target = $region9
    $region8: #{tpu_custom_call.1} parent=1 // pred_region
      %s23 = ssub.s32 64, 64
      %24 = vsyncadd [#allocation6], %s23
      %s26 = sshll.u32 [#allocation5], 4
      %s27 = int_to_ptr.vmem [resolvable:$true] %s26
      %29 = dma.hbm_to_vmem [thread:$0]  %s1, 64, %s27, [#allocation6]
    $region9: #{tpu_custom_call.1} parent=1 // pred_fallthru
      _
    // Predicated region
    $region10: #{tpu_custom_call.1} parent=1 // pred_check
      _
    $region11: #{tpu_custom_call.1} parent=1 // pred_check_branch
      %31 = sbr.rel (0) target = $region13
    $region12: #{tpu_custom_call.1} parent=1 // pred_region
      %32 = dma.done [#allocation3], 16
    $region13: #{tpu_custom_call.1} parent=1 // pred_fallthru
      _
    // Predicated region
    $region14: #{tpu_custom_call.1} parent=1 // pred_check
      _
    $region15: #{tpu_custom_call.1} parent=1 // pred_check_branch
      %34 = sbr.rel (0) target = $region17
    $region16: #{tpu_custom_call.1} parent=1 // pred_region
      %35 = dma.done [#allocation6], 64
    $region17: #{tpu_custom_call.1} parent=1 // pred_fallthru
      _
    %v36 = vld [vmem:[#allocation2] sm:$0x1]
    %38 = vset.pattern.permute.xlu0 0
    %39 = vperm.xlu0 %38, %v36
    %v40 = vpop.permute.xlu0 %39
    %v42 = vlaneseq
    %v43 = vshrl.u32 %v42, 7
    %v44 = vsub.s32 0, %v43
    %v45 = vrot.slane %v40, %v44
    %46 = vset.pattern.permute.xlu0 1
    %47 = vperm.xlu0 %46, %v36
    %v48 = vpop.permute.xlu0 %47
    %v50 = vlaneseq
    %v51 = vshrl.u32 %v50, 7
    %v52 = vsub.s32 0, %v51
    %v53 = vrot.slane %v48, %v52
    %54 = vset.pattern.permute.xlu0 2
    %55 = vperm.xlu0 %54, %v36
    %v56 = vpop.permute.xlu0 %55
    %v58 = vlaneseq
    %v59 = vshrl.u32 %v58, 7
    %v60 = vsub.s32 0, %v59
    %v61 = vrot.slane %v56, %v60
    %62 = vset.pattern.permute.xlu0 3
    %63 = vperm.xlu0 %62, %v36
    %v64 = vpop.permute.xlu0 %63
    %v66 = vlaneseq
    %v67 = vshrl.u32 %v66, 7
    %v68 = vsub.s32 0, %v67
    %v69 = vrot.slane %v64, %v68
    %70 = vset.pattern.permute.xlu0 4
    %71 = vperm.xlu0 %70, %v36
    %v72 = vpop.permute.xlu0 %71
    %v74 = vlaneseq
    %v75 = vshrl.u32 %v74, 7
    %v76 = vsub.s32 0, %v75
    %v77 = vrot.slane %v72, %v76
    %78 = vset.pattern.permute.xlu0 5
    %79 = vperm.xlu0 %78, %v36
    %v80 = vpop.permute.xlu0 %79
    %v82 = vlaneseq
    %v83 = vshrl.u32 %v82, 7
    %v84 = vsub.s32 0, %v83
    %v85 = vrot.slane %v80, %v84
    %86 = vset.pattern.permute.xlu0 6
    %87 = vperm.xlu0 %86, %v36
    %v88 = vpop.permute.xlu0 %87
    %v90 = vlaneseq
    %v91 = vshrl.u32 %v90, 7
    %v92 = vsub.s32 0, %v91
    %v93 = vrot.slane %v88, %v92
    %94 = vset.pattern.permute.xlu0 7
    %95 = vperm.xlu0 %94, %v36
    %v96 = vpop.permute.xlu0 %95
    %v98 = vlaneseq
    %v99 = vshrl.u32 %v98, 7
    %v100 = vsub.s32 0, %v99
    %v101 = vrot.slane %v96, %v100
    %102 = vset.pattern.permute.xlu0 8
    %103 = vperm.xlu0 %102, %v36
    %v104 = vpop.permute.xlu0 %103
    %v106 = vlaneseq
    %v107 = vshrl.u32 %v106, 7
    %v108 = vsub.s32 0, %v107
    %v109 = vrot.slane %v104, %v108
    %110 = vset.pattern.permute.xlu0 9
    %111 = vperm.xlu0 %110, %v36
    %v112 = vpop.permute.xlu0 %111
    %v114 = vlaneseq
    %v115 = vshrl.u32 %v114, 7
    %v116 = vsub.s32 0, %v115
    %v117 = vrot.slane %v112, %v116
    %118 = vset.pattern.permute.xlu0 10
    %119 = vperm.xlu0 %118, %v36
    %v120 = vpop.permute.xlu0 %119
    %v122 = vlaneseq
    %v123 = vshrl.u32 %v122, 7
    %v124 = vsub.s32 0, %v123
    %v125 = vrot.slane %v120, %v124
    %126 = vset.pattern.permute.xlu0 11
    %127 = vperm.xlu0 %126, %v36
    %v128 = vpop.permute.xlu0 %127
    %v130 = vlaneseq
    %v131 = vshrl.u32 %v130, 7
    %v132 = vsub.s32 0, %v131
    %v133 = vrot.slane %v128, %v132
    %134 = vset.pattern.permute.xlu0 12
    %135 = vperm.xlu0 %134, %v36
    %v136 = vpop.permute.xlu0 %135
    %v138 = vlaneseq
    %v139 = vshrl.u32 %v138, 7
    %v140 = vsub.s32 0, %v139
    %v141 = vrot.slane %v136, %v140
    %142 = vset.pattern.permute.xlu0 13
    %143 = vperm.xlu0 %142, %v36
    %v144 = vpop.permute.xlu0 %143
    %v146 = vlaneseq
    %v147 = vshrl.u32 %v146, 7
    %v148 = vsub.s32 0, %v147
    %v149 = vrot.slane %v144, %v148
    %150 = vset.pattern.permute.xlu0 14
    %151 = vperm.xlu0 %150, %v36
    %v152 = vpop.permute.xlu0 %151
    %v154 = vlaneseq
    %v155 = vshrl.u32 %v154, 7
    %v156 = vsub.s32 0, %v155
    %v157 = vrot.slane %v152, %v156
    %158 = vset.pattern.permute.xlu0 15
    %159 = vperm.xlu0 %158, %v36
    %v160 = vpop.permute.xlu0 %159
    %v162 = vlaneseq
    %v163 = vshrl.u32 %v162, 7
    %v164 = vsub.s32 0, %v163
    %v165 = vrot.slane %v160, %v164
    %vm166 = vcmask 261120
    %v167 = vsel %vm166, %v45, %v53
    %vm168 = vcmask 523264
    %v169 = vsel %vm168, %v167, %v61
    %vm170 = vcmask 785408
    %v171 = vsel %vm170, %v169, %v69
    %v172 = vsel %vm166, %v77, %v85
    %v173 = vsel %vm168, %v172, %v93
    %v174 = vsel %vm170, %v173, %v101
    %v175 = vsel %vm166, %v109, %v117
    %v176 = vsel %vm168, %v175, %v125
    %v177 = vsel %vm170, %v176, %v133
    %v178 = vsel %vm166, %v141, %v149
    %v179 = vsel %vm168, %v178, %v157
    %v180 = vsel %vm170, %v179, %v165
    %v181 = vld [vmem:[#allocation5] sm:$0xf]
    %v183 = vlaneseq
    %v184 = vshrl.u32 %v183, 7
    %v185 = vsub.s32 0, %v184
    %v186 = vrot.slane %v181, %v185
    %v187 = vlaneseq
    %v188 = vshrl.u32 %v187, 7
    %v189 = vsub.s32 1, %v188
    %v190 = vrot.slane %v181, %v189
    %v191 = vlaneseq
    %v192 = vshrl.u32 %v191, 7
    %v193 = vsub.s32 2, %v192
    %v194 = vrot.slane %v181, %v193
    %v195 = vlaneseq
    %v196 = vshrl.u32 %v195, 7
    %v197 = vsub.s32 3, %v196
    %v198 = vrot.slane %v181, %v197
    %v203 = vmul.f32 %v171, %v186
    %v204 = vmul.f32 %v174, %v190
    %v205 = vmul.f32 %v177, %v194
    %v206 = vmul.f32 %v180, %v198
    %v207 = vand.u32 2147483647, %v203
    %vm208 = vcmp.le.f32.partialorder %v207, 0.7853982
    %vm209 = vcmp.lt.s32.totalorder %v203, 0
    %v210 = vand.u32 %v203, 2139095040
    %v211 = vshrl.u32 %v210, 23
    %v212 = vsub.s32 %v211, 127
    %v213 = vand.u32 2147483647, %v203
    %v214 = vand.u32 %v213, 8388607
    %v215 = vor.u32 %v214, 8388608
    %v216 = vsub.s32 0, %v215
    %v217 = vadd.s32 %v212, 1
    %vm218 = vcmp.gt.s32.totalorder %v217, 0
    %v219 = vsel %vm218, %v217, 0
    %v220 = vshrl.u32 %v219, 5
    %v221 = vand.u32 %v219, 31
    %v222 = vsub.s32 32, %v221
    %v223 = vshrl.u32 683565275, %v222
    %v224 = vshll.u32 683565275, %v221
    %v225 = vshrl.u32 2475754826, %v222
    %v226 = vor.u32 %v224, %v225
    %v227 = vshll.u32 2475754826, %v221
    %v228 = vshrl.u32 2131351028, %v222
    %v229 = vor.u32 %v227, %v228
    %v230 = vshll.u32 2131351028, %v221
    %v231 = vshrl.u32 2102212464, %v222
    %v232 = vor.u32 %v230, %v231
    %v233 = vshll.u32 2102212464, %v221
    %v234 = vshrl.u32 920167782, %v222
    %v235 = vor.u32 %v233, %v234
    %v236 = vshll.u32 920167782, %v221
    %v237 = vshrl.u32 1326507024, %v222
    %v238 = vor.u32 %v236, %v237
    %vm239 = vcmp.lt.s32.totalorder %v220, 1
    %vm240 = vcmp.lt.s32.totalorder %v220, 2
    %vm241 = vcmp.lt.s32.totalorder %v220, 3
    %vm242 = vcmp.lt.s32.totalorder %v220, 4
    %v243 = vsel %vm239, %v223, %v226
    %v244 = vsel %vm242, %v232, 2102212464
    %v245 = vsel %vm241, %v229, %v244
    %v246 = vsel %vm240, %v243, %v245
    %v247 = vsel %vm239, %v226, %v229
    %v248 = vsel %vm242, %v235, 920167782
    %v249 = vsel %vm241, %v232, %v248
    %v250 = vsel %vm240, %v247, %v249
    %v251 = vsel %vm239, %v229, %v232
    %v252 = vsel %vm242, %v238, 1326507024
    %v253 = vsel %vm241, %v235, %v252
    %v254 = vsel %vm240, %v251, %v253
    %v255 = vshll.u32 %v215, 8
    %v256 = vmul.u32.u64.compose %v255, %v254
    %v257 = vextract.low.u32 %v256
    %v258 = vextract.high.u32 %v256
    %v259 = vmul.u32.u64.compose %v255, %v250
    %v260 = vextract.low.u32 %v259
    %v261 = vextract.high.u32 %v259
    %v262 = vmul.u32 %v255, %v246
    %v263 = vadd.s32 %v258, %v260
    %vm264 = vc.u32 %v258, %v260
    %v265 = vadd.s32 %v261, 1
    %v266 = vsel %vm264, %v265, %v261
    %v267 = vadd.s32 %v262, %v266
    %v268 = vadd.s32 %v267, 536870912
    %v269 = vshrl.u32 %v268, 30
    %v270 = vshll.u32 %v269, 30
    %v271 = vsub.s32 %v267, %v270
    %vm272 = vcmp.lt.s32.totalorder %v271, 0
    %v273 = vsub.s32 0, %v271
    %v274 = vsel %vm272, %v273, %v271
    %v275 = vclz %v274
    %v276 = vsub.s32 %v275, 2
    %vm277 = vcmp.gt.s32.totalorder 0, %v276
    %v278 = vsel %vm277, 0, %v276
    %v279 = vsub.s32 32, %v278
    %v280 = vshll.u32 %v271, %v278
    %v281 = vshrl.u32 %v263, %v279
    %v282 = vor.u32 %v280, %v281
    %v283 = vsub.s32 4294967266, %v278
    %v284 = vadd.s32 %v283, 127
    %v285 = vshll.u32 %v284, 23
    %v286 = vor.u32 4788187, %v285
    %v287 = vand.u32 2147483647, %v286
    %v289 = vcvt.s32.f32 %v282
    %v290 = vmul.f32 %v289, %v287
    %v291 = vxor.u32 %v290, 2147483648
    %v292 = vsel %vm209, %v291, %v290
    %v293 = vsub.s32 4, %v269
    %v294 = vsel %vm209, %v293, %v269
    %v295 = vsel %vm208, %v203, %v292
    %v296 = vsel %vm208, 0, %v294
    %v297 = vcosq.f32.pop %v295
    %v298 = vsinq.f32.pop %v295
    %vm299 = vweird.f32 %v203
    %v300 = vand.u32 %v296, 3
    %vm301 = vcmp.lt.s32.totalorder %v300, 2
    %vm302 = vcmp.eq.s32.totalorder %v300, 0
    %v303 = vxor.u32 %v298, 2147483648
    %v304 = vsel %vm302, %v297, %v303
    %vm305 = vcmp.eq.s32.totalorder %v300, 2
    %v306 = vxor.u32 %v297, 2147483648
    %v307 = vsel %vm305, %v306, %v298
    %v308 = vsel %vm301, %v304, %v307
    %v309 = vsel %vm299, nan, %v308
    %v310 = vand.u32 2147483647, %v204
    %vm311 = vcmp.le.f32.partialorder %v310, 0.7853982
    %vm312 = vcmp.lt.s32.totalorder %v204, 0
    %v313 = vand.u32 %v204, 2139095040
    %v314 = vshrl.u32 %v313, 23
    %v315 = vsub.s32 %v314, 127
    %v316 = vand.u32 2147483647, %v204
    %v317 = vand.u32 %v316, 8388607
    %v318 = vor.u32 %v317, 8388608
    %v319 = vsub.s32 0, %v318
    %v320 = vadd.s32 %v315, 1
    %vm321 = vcmp.gt.s32.totalorder %v320, 0
    %v322 = vsel %vm321, %v320, 0
    %v323 = vshrl.u32 %v322, 5
    %v324 = vand.u32 %v322, 31
    %v325 = vsub.s32 32, %v324
    %v326 = vshrl.u32 683565275, %v325
    %v327 = vshll.u32 683565275, %v324
    %v328 = vshrl.u32 2475754826, %v325
    %v329 = vor.u32 %v327, %v328
    %v330 = vshll.u32 2475754826, %v324
    %v331 = vshrl.u32 2131351028, %v325
    %v332 = vor.u32 %v330, %v331
    %v333 = vshll.u32 2131351028, %v324
    %v334 = vshrl.u32 2102212464, %v325
    %v335 = vor.u32 %v333, %v334
    %v336 = vshll.u32 2102212464, %v324
    %v337 = vshrl.u32 920167782, %v325
    %v338 = vor.u32 %v336, %v337
    %v339 = vshll.u32 920167782, %v324
    %v340 = vshrl.u32 1326507024, %v325
    %v341 = vor.u32 %v339, %v340
    %vm342 = vcmp.lt.s32.totalorder %v323, 1
    %vm343 = vcmp.lt.s32.totalorder %v323, 2
    %vm344 = vcmp.lt.s32.totalorder %v323, 3
    %vm345 = vcmp.lt.s32.totalorder %v323, 4
    %v346 = vsel %vm342, %v326, %v329
    %v347 = vsel %vm345, %v335, 2102212464
    %v348 = vsel %vm344, %v332, %v347
    %v349 = vsel %vm343, %v346, %v348
    %v350 = vsel %vm342, %v329, %v332
    %v351 = vsel %vm345, %v338, 920167782
    %v352 = vsel %vm344, %v335, %v351
    %v353 = vsel %vm343, %v350, %v352
    %v354 = vsel %vm342, %v332, %v335
    %v355 = vsel %vm345, %v341, 1326507024
    %v356 = vsel %vm344, %v338, %v355
    %v357 = vsel %vm343, %v354, %v356
    %v358 = vshll.u32 %v318, 8
    %v359 = vmul.u32.u64.compose %v358, %v357
    %v360 = vextract.low.u32 %v359
    %v361 = vextract.high.u32 %v359
    %v362 = vmul.u32.u64.compose %v358, %v353
    %v363 = vextract.low.u32 %v362
    %v364 = vextract.high.u32 %v362
    %v365 = vmul.u32 %v358, %v349
    %v366 = vadd.s32 %v361, %v363
    %vm367 = vc.u32 %v361, %v363
    %v368 = vadd.s32 %v364, 1
    %v369 = vsel %vm367, %v368, %v364
    %v370 = vadd.s32 %v365, %v369
    %v371 = vadd.s32 %v370, 536870912
    %v372 = vshrl.u32 %v371, 30
    %v373 = vshll.u32 %v372, 30
    %v374 = vsub.s32 %v370, %v373
    %vm375 = vcmp.lt.s32.totalorder %v374, 0
    %v376 = vsub.s32 0, %v374
    %v377 = vsel %vm375, %v376, %v374
    %v378 = vclz %v377
    %v379 = vsub.s32 %v378, 2
    %vm380 = vcmp.gt.s32.totalorder 0, %v379
    %v381 = vsel %vm380, 0, %v379
    %v382 = vsub.s32 32, %v381
    %v383 = vshll.u32 %v374, %v381
    %v384 = vshrl.u32 %v366, %v382
    %v385 = vor.u32 %v383, %v384
    %v386 = vsub.s32 4294967266, %v381
    %v387 = vadd.s32 %v386, 127
    %v388 = vshll.u32 %v387, 23
    %v389 = vor.u32 4788187, %v388
    %v390 = vand.u32 2147483647, %v389
    %v392 = vcvt.s32.f32 %v385
    %v393 = vmul.f32 %v392, %v390
    %v394 = vxor.u32 %v393, 2147483648
    %v395 = vsel %vm312, %v394, %v393
    %v396 = vsub.s32 4, %v372
    %v397 = vsel %vm312, %v396, %v372
    %v398 = vsel %vm311, %v204, %v395
    %v399 = vsel %vm311, 0, %v397
    %v400 = vcosq.f32.pop %v398
    %v401 = vsinq.f32.pop %v398
    %vm402 = vweird.f32 %v204
    %v403 = vand.u32 %v399, 3
    %vm404 = vcmp.lt.s32.totalorder %v403, 2
    %vm405 = vcmp.eq.s32.totalorder %v403, 0
    %v406 = vxor.u32 %v401, 2147483648
    %v407 = vsel %vm405, %v400, %v406
    %vm408 = vcmp.eq.s32.totalorder %v403, 2
    %v409 = vxor.u32 %v400, 2147483648
    %v410 = vsel %vm408, %v409, %v401
    %v411 = vsel %vm404, %v407, %v410
    %v412 = vsel %vm402, nan, %v411
    %v413 = vand.u32 2147483647, %v205
    %vm414 = vcmp.le.f32.partialorder %v413, 0.7853982
    %vm415 = vcmp.lt.s32.totalorder %v205, 0
    %v416 = vand.u32 %v205, 2139095040
    %v417 = vshrl.u32 %v416, 23
    %v418 = vsub.s32 %v417, 127
    %v419 = vand.u32 2147483647, %v205
    %v420 = vand.u32 %v419, 8388607
    %v421 = vor.u32 %v420, 8388608
    %v422 = vsub.s32 0, %v421
    %v423 = vadd.s32 %v418, 1
    %vm424 = vcmp.gt.s32.totalorder %v423, 0
    %v425 = vsel %vm424, %v423, 0
    %v426 = vshrl.u32 %v425, 5
    %v427 = vand.u32 %v425, 31
    %v428 = vsub.s32 32, %v427
    %v429 = vshrl.u32 683565275, %v428
    %v430 = vshll.u32 683565275, %v427
    %v431 = vshrl.u32 2475754826, %v428
    %v432 = vor.u32 %v430, %v431
    %v433 = vshll.u32 2475754826, %v427
    %v434 = vshrl.u32 2131351028, %v428
    %v435 = vor.u32 %v433, %v434
    %v436 = vshll.u32 2131351028, %v427
    %v437 = vshrl.u32 2102212464, %v428
    %v438 = vor.u32 %v436, %v437
    %v439 = vshll.u32 2102212464, %v427
    %v440 = vshrl.u32 920167782, %v428
    %v441 = vor.u32 %v439, %v440
    %v442 = vshll.u32 920167782, %v427
    %v443 = vshrl.u32 1326507024, %v428
    %v444 = vor.u32 %v442, %v443
    %vm445 = vcmp.lt.s32.totalorder %v426, 1
    %vm446 = vcmp.lt.s32.totalorder %v426, 2
    %vm447 = vcmp.lt.s32.totalorder %v426, 3
    %vm448 = vcmp.lt.s32.totalorder %v426, 4
    %v449 = vsel %vm445, %v429, %v432
    %v450 = vsel %vm448, %v438, 2102212464
    %v451 = vsel %vm447, %v435, %v450
    %v452 = vsel %vm446, %v449, %v451
    %v453 = vsel %vm445, %v432, %v435
    %v454 = vsel %vm448, %v441, 920167782
    %v455 = vsel %vm447, %v438, %v454
    %v456 = vsel %vm446, %v453, %v455
    %v457 = vsel %vm445, %v435, %v438
    %v458 = vsel %vm448, %v444, 1326507024
    %v459 = vsel %vm447, %v441, %v458
    %v460 = vsel %vm446, %v457, %v459
    %v461 = vshll.u32 %v421, 8
    %v462 = vmul.u32.u64.compose %v461, %v460
    %v463 = vextract.low.u32 %v462
    %v464 = vextract.high.u32 %v462
    %v465 = vmul.u32.u64.compose %v461, %v456
    %v466 = vextract.low.u32 %v465
    %v467 = vextract.high.u32 %v465
    %v468 = vmul.u32 %v461, %v452
    %v469 = vadd.s32 %v464, %v466
    %vm470 = vc.u32 %v464, %v466
    %v471 = vadd.s32 %v467, 1
    %v472 = vsel %vm470, %v471, %v467
    %v473 = vadd.s32 %v468, %v472
    %v474 = vadd.s32 %v473, 536870912
    %v475 = vshrl.u32 %v474, 30
    %v476 = vshll.u32 %v475, 30
    %v477 = vsub.s32 %v473, %v476
    %vm478 = vcmp.lt.s32.totalorder %v477, 0
    %v479 = vsub.s32 0, %v477
    %v480 = vsel %vm478, %v479, %v477
    %v481 = vclz %v480
    %v482 = vsub.s32 %v481, 2
    %vm483 = vcmp.gt.s32.totalorder 0, %v482
    %v484 = vsel %vm483, 0, %v482
    %v485 = vsub.s32 32, %v484
    %v486 = vshll.u32 %v477, %v484
    %v487 = vshrl.u32 %v469, %v485
    %v488 = vor.u32 %v486, %v487
    %v489 = vsub.s32 4294967266, %v484
    %v490 = vadd.s32 %v489, 127
    %v491 = vshll.u32 %v490, 23
    %v492 = vor.u32 4788187, %v491
    %v493 = vand.u32 2147483647, %v492
    %v495 = vcvt.s32.f32 %v488
    %v496 = vmul.f32 %v495, %v493
    %v497 = vxor.u32 %v496, 2147483648
    %v498 = vsel %vm415, %v497, %v496
    %v499 = vsub.s32 4, %v475
    %v500 = vsel %vm415, %v499, %v475
    %v501 = vsel %vm414, %v205, %v498
    %v502 = vsel %vm414, 0, %v500
    %v503 = vcosq.f32.pop %v501
    %v504 = vsinq.f32.pop %v501
    %vm505 = vweird.f32 %v205
    %v506 = vand.u32 %v502, 3
    %vm507 = vcmp.lt.s32.totalorder %v506, 2
    %vm508 = vcmp.eq.s32.totalorder %v506, 0
    %v509 = vxor.u32 %v504, 2147483648
    %v510 = vsel %vm508, %v503, %v509
    %vm511 = vcmp.eq.s32.totalorder %v506, 2
    %v512 = vxor.u32 %v503, 2147483648
    %v513 = vsel %vm511, %v512, %v504
    %v514 = vsel %vm507, %v510, %v513
    %v515 = vsel %vm505, nan, %v514
    %v516 = vand.u32 2147483647, %v206
    %vm517 = vcmp.le.f32.partialorder %v516, 0.7853982
    %vm518 = vcmp.lt.s32.totalorder %v206, 0
    %v519 = vand.u32 %v206, 2139095040
    %v520 = vshrl.u32 %v519, 23
    %v521 = vsub.s32 %v520, 127
    %v522 = vand.u32 2147483647, %v206
    %v523 = vand.u32 %v522, 8388607
    %v524 = vor.u32 %v523, 8388608
    %v525 = vsub.s32 0, %v524
    %v526 = vadd.s32 %v521, 1
    %vm527 = vcmp.gt.s32.totalorder %v526, 0
    %v528 = vsel %vm527, %v526, 0
    %v529 = vshrl.u32 %v528, 5
    %v530 = vand.u32 %v528, 31
    %v531 = vsub.s32 32, %v530
    %v532 = vshrl.u32 683565275, %v531
    %v533 = vshll.u32 683565275, %v530
    %v534 = vshrl.u32 2475754826, %v531
    %v535 = vor.u32 %v533, %v534
    %v536 = vshll.u32 2475754826, %v530
    %v537 = vshrl.u32 2131351028, %v531
    %v538 = vor.u32 %v536, %v537
    %v539 = vshll.u32 2131351028, %v530
    %v540 = vshrl.u32 2102212464, %v531
    %v541 = vor.u32 %v539, %v540
    %v542 = vshll.u32 2102212464, %v530
    %v543 = vshrl.u32 920167782, %v531
    %v544 = vor.u32 %v542, %v543
    %v545 = vshll.u32 920167782, %v530
    %v546 = vshrl.u32 1326507024, %v531
    %v547 = vor.u32 %v545, %v546
    %vm548 = vcmp.lt.s32.totalorder %v529, 1
    %vm549 = vcmp.lt.s32.totalorder %v529, 2
    %vm550 = vcmp.lt.s32.totalorder %v529, 3
    %vm551 = vcmp.lt.s32.totalorder %v529, 4
    %v552 = vsel %vm548, %v532, %v535
    %v553 = vsel %vm551, %v541, 2102212464
    %v554 = vsel %vm550, %v538, %v553
    %v555 = vsel %vm549, %v552, %v554
    %v556 = vsel %vm548, %v535, %v538
    %v557 = vsel %vm551, %v544, 920167782
    %v558 = vsel %vm550, %v541, %v557
    %v559 = vsel %vm549, %v556, %v558
    %v560 = vsel %vm548, %v538, %v541
    %v561 = vsel %vm551, %v547, 1326507024
    %v562 = vsel %vm550, %v544, %v561
    %v563 = vsel %vm549, %v560, %v562
    %v564 = vshll.u32 %v524, 8
    %v565 = vmul.u32.u64.compose %v564, %v563
    %v566 = vextract.low.u32 %v565
    %v567 = vextract.high.u32 %v565
    %v568 = vmul.u32.u64.compose %v564, %v559
    %v569 = vextract.low.u32 %v568
    %v570 = vextract.high.u32 %v568
    %v571 = vmul.u32 %v564, %v555
    %v572 = vadd.s32 %v567, %v569
    %vm573 = vc.u32 %v567, %v569
    %v574 = vadd.s32 %v570, 1
    %v575 = vsel %vm573, %v574, %v570
    %v576 = vadd.s32 %v571, %v575
    %v577 = vadd.s32 %v576, 536870912
    %v578 = vshrl.u32 %v577, 30
    %v579 = vshll.u32 %v578, 30
    %v580 = vsub.s32 %v576, %v579
    %vm581 = vcmp.lt.s32.totalorder %v580, 0
    %v582 = vsub.s32 0, %v580
    %v583 = vsel %vm581, %v582, %v580
    %v584 = vclz %v583
    %v585 = vsub.s32 %v584, 2
    %vm586 = vcmp.gt.s32.totalorder 0, %v585
    %v587 = vsel %vm586, 0, %v585
    %v588 = vsub.s32 32, %v587
    %v589 = vshll.u32 %v580, %v587
    %v590 = vshrl.u32 %v572, %v588
    %v591 = vor.u32 %v589, %v590
    %v592 = vsub.s32 4294967266, %v587
    %v593 = vadd.s32 %v592, 127
    %v594 = vshll.u32 %v593, 23
    %v595 = vor.u32 4788187, %v594
    %v596 = vand.u32 2147483647, %v595
    %v598 = vcvt.s32.f32 %v591
    %v599 = vmul.f32 %v598, %v596
    %v600 = vxor.u32 %v599, 2147483648
    %v601 = vsel %vm518, %v600, %v599
    %v602 = vsub.s32 4, %v578
    %v603 = vsel %vm518, %v602, %v578
    %v604 = vsel %vm517, %v206, %v601
    %v605 = vsel %vm517, 0, %v603
    %v606 = vcosq.f32.pop %v604
    %v607 = vsinq.f32.pop %v604
    %vm608 = vweird.f32 %v206
    %v609 = vand.u32 %v605, 3
    %vm610 = vcmp.lt.s32.totalorder %v609, 2
    %vm611 = vcmp.eq.s32.totalorder %v609, 0
    %v612 = vxor.u32 %v607, 2147483648
    %v613 = vsel %vm611, %v606, %v612
    %vm614 = vcmp.eq.s32.totalorder %v609, 2
    %v615 = vxor.u32 %v606, 2147483648
    %v616 = vsel %vm614, %v615, %v607
    %v617 = vsel %vm610, %v613, %v616
    %v618 = vsel %vm608, nan, %v617
    %v623 = vcombine.low %v309, %v412
    %v624 = vcombine.low %v515, %v618
    %v626 = vunpack.c.l.s4 1966171168
    %v627 = vunpack.c.0.s8 %v626
    %v628 = vlaneseq
    %v629 = vshrl.u32 %v628, 7
    %v630 = vsub.s32 %v627, %v629
    %v631 = vrot.slane %v623, %v630
    %v633 = vunpack.c.l.s4 1966171168
    %v634 = vunpack.c.0.s8 %v633
    %v635 = vlaneseq
    %v636 = vshrl.u32 %v635, 7
    %v637 = vsub.s32 %v634, %v636
    %v638 = vrot.slane %v624, %v637
    %v639 = vcombine.low %v631, %v638
    %v641 = vunpack.c.l.s4 1966171168
    %v642 = vunpack.c.0.s8 %v641
    %v643 = vlaneseq
    %v644 = vshrl.u32 %v643, 7
    %v645 = vsub.s32 %v642, %v644
    %v646 = vrot.slane %v639, %v645
    %v648 = vlaneseq
    %vm649 = vcmp.ge.s32.totalorder %v648, 0
    %vm650 = vcmp.lt.s32.totalorder %v648, 512
    %vm651 = vmand %vm649, %vm650
    %652 = vst.msk [vmem:[#allocation7] sm:$0xf] %vm651, %v646
    // Predicated region
    $region18: #{tpu_custom_call.1} parent=1 // pred_check
      _
    $region19: #{tpu_custom_call.1} parent=1 // pred_check_branch
      %654 = sbr.rel (0) target = $region21
    $region20: #{tpu_custom_call.1} parent=1 // pred_region
      %s656 = ssub.s32 64, 64
      %657 = vsyncadd [#allocation4], %s656
      %s659 = sshll.u32 [#allocation7], 4
      %s660 = int_to_ptr.vmem [resolvable:$true] %s659
      %662 = dma.vmem_to_hbm [thread:$0]  %s660, 64, %s2, [#allocation4]
    $region21: #{tpu_custom_call.1} parent=1 // pred_fallthru
      _
    // Predicated region
    $region22: #{tpu_custom_call.1} parent=1 // pred_check
      _
    $region23: #{tpu_custom_call.1} parent=1 // pred_check_branch
      %664 = sbr.rel (0) target = $region25
    $region24: #{tpu_custom_call.1} parent=1 // pred_region
      %665 = dma.done [#allocation4], 64
    $region25: #{tpu_custom_call.1} parent=1 // pred_fallthru
      _
    %666 = vsyncpa [#allocation3], 1
    %667 = vsyncpa [#allocation6], 1
    %668 = vsyncpa [#allocation4], 1

</llo_original>
